<compile_context>
chip_gen: v6e
topology: v6e:2x2x1
jax: 0.10.0
libtpu: 0.0.40
codegen_flags: <defaults>
</compile_context>

<pallas_src>
import jax
import jax.numpy as jnp
from jax.experimental import pallas as pl
from jax.experimental.pallas import tpu as pltpu


def _cox_nll_kernel(ev_row_ref, ev_col_ref, t_row_ref, t_col_ref, pred_ref, o_ref):
    # ev_row_ref: (1, N)  event indicator (1 = event, 0 = censored), lanes = samples
    # ev_col_ref: (N, 1)  same, sublanes = samples
    # t_row_ref:  (1, N)  time_j on lanes
    # t_col_ref:  (N, 1)  time_i on sublanes
    # pred_ref:   (1, N)  log hazards
    # o_ref:      (1, 1)  scalar loss
    pred = pred_ref[...].astype(jnp.float32)        # (1, N)
    ev_r = ev_row_ref[...].astype(jnp.float32)      # (1, N)
    ev_c = ev_col_ref[...].astype(jnp.float32)      # (N, 1)
    t_r = t_row_ref[...].astype(jnp.float32)        # (1, N)
    t_c = t_col_ref[...].astype(jnp.float32)        # (N, 1)

    # Numerically stable exp: subtract the global max of the log hazards.
    m = jnp.max(pred, axis=-1, keepdims=True)       # (1, 1)
    e = jnp.exp(pred - m)                           # (1, N)

    # Risk set mask[i, j] = 1 iff time_j >= time_i  (i on sublanes, j on lanes).
    risk = (t_r >= t_c).astype(jnp.float32)         # (N, N)

    # log(denominator_i) - m = log(sum_j risk[i, j] * exp(pred_j - m))
    denom = jnp.sum(risk * e, axis=-1, keepdims=True)    # (N, 1) lane reduce
    log_denom = jnp.log(denom)                           # (N, 1)

    # Partial log-likelihood summed over events:
    #   sum_i ev_i * [(pred_i - m) - (log denominator_i - m)]
    term_num = jnp.sum(ev_r * (pred - m), axis=-1, keepdims=True)   # (1, 1)
    term_den = jnp.sum(ev_c * log_denom, axis=0, keepdims=True)     # (1, 1)
    n_events = jnp.sum(ev_r, axis=-1, keepdims=True)                # (1, 1)

    # reduction='mean' over events; 0.0 if there are no events (torchsurv behavior).
    loss = jnp.where(
        n_events > 0.0,
        -(term_num - term_den) / jnp.maximum(n_events, 1.0),
        jnp.zeros_like(n_events),
    )
    o_ref[...] = loss


def custom_loss_forward(event, time, pred):
    """Matches custom_loss.forward(event, time, pred): Cox neg partial log-lik (mean)."""
    pred_row = jnp.asarray(pred).reshape(1, -1)          # (1, N) log hazards
    n = pred_row.shape[1]
    ev = jnp.asarray(event).astype(jnp.float32)          # bool -> f32 (tiny; avoids i1 refs)
    t = jnp.asarray(time)

    out = pl.pallas_call(
        _cox_nll_kernel,
        out_shape=jax.ShapeDtypeStruct((1, 1), jnp.float32),
        in_specs=[
            pl.BlockSpec(memory_space=pltpu.VMEM),   # event row (1, N)
            pl.BlockSpec(memory_space=pltpu.VMEM),   # event col (N, 1)
            pl.BlockSpec(memory_space=pltpu.VMEM),   # time  row (1, N)
            pl.BlockSpec(memory_space=pltpu.VMEM),   # time  col (N, 1)
            pl.BlockSpec(memory_space=pltpu.VMEM),   # pred  row (1, N)
        ],
        out_specs=pl.BlockSpec(memory_space=pltpu.VMEM),
    )(ev.reshape(1, n), ev.reshape(n, 1), t.reshape(1, n), t.reshape(n, 1), pred_row)
    return out[0, 0]


if __name__ == "__main__":
    key = jax.random.PRNGKey(0)
    k_pred, k_perm = jax.random.split(key)

    n = 8
    pred = jax.random.normal(k_pred, (n, 1), jnp.float32)                  # log hazards
    # Distinct survival times (no ties -> exactly the no-ties torchsurv path).
    time = jnp.arange(1.0, n + 1.0, dtype=jnp.float32)[jax.random.permutation(k_perm, n)]
    event = jnp.array([1, 0, 1, 1, 0, 1, 0, 1], dtype=bool)                # >= 1 event

    loss = custom_loss_forward(event, time, pred)
    loss = jax.block_until_ready(loss)

    # Pure-JAX reference: sort by time, reverse log-cumsum-exp denominator,
    # mean of -(log_hz - log_denom) over events (torchsurv no-ties algorithm).
    lh = pred.reshape(-1)
    order = jnp.argsort(time)
    lh_s, ev_s = lh[order], event[order].astype(jnp.float32)
    rev = lh_s[::-1]
    mx = jnp.max(rev)
    log_denom_s = (jnp.log(jnp.cumsum(jnp.exp(rev - mx))) + mx)[::-1]
    pll = (lh_s - log_denom_s) * ev_s
    ref = -(jnp.sum(pll) / jnp.sum(ev_s))

    assert jnp.allclose(loss, ref, atol=1e-5, rtol=1e-5), (loss, ref)
    print("KERNEL_OK")
</pallas_src>

<mosaic_0001>
module attributes {stable_mosaic.version = 11 : i64} {
  func.func @_cox_nll_kernel(%arg0: memref<1x8xf32, #tpu.memory_space<vmem>>, %arg1: memref<8x1xf32, #tpu.memory_space<vmem>>, %arg2: memref<1x8xf32, #tpu.memory_space<vmem>>, %arg3: memref<8x1xf32, #tpu.memory_space<vmem>>, %arg4: memref<1x8xf32, #tpu.memory_space<vmem>>, %arg5: memref<1x1xf32, #tpu.memory_space<vmem>>) attributes {dimension_semantics = [], scalar_prefetch = 0 : i64, scratch_operands = 0 : i64, tpu.core_type = #tpu.core_type<tc>} {
    %c0 = arith.constant 0 : index
    %c0_0 = arith.constant 0 : index
    %0 = vector.load %arg4[%c0, %c0_0] : memref<1x8xf32, #tpu.memory_space<vmem>>, vector<1x8xf32>
    %c0_1 = arith.constant 0 : index
    %c0_2 = arith.constant 0 : index
    %1 = vector.load %arg0[%c0_1, %c0_2] : memref<1x8xf32, #tpu.memory_space<vmem>>, vector<1x8xf32>
    %c0_3 = arith.constant 0 : index
    %c0_4 = arith.constant 0 : index
    %2 = vector.load %arg1[%c0_3, %c0_4] : memref<8x1xf32, #tpu.memory_space<vmem>>, vector<8x1xf32>
    %c0_5 = arith.constant 0 : index
    %c0_6 = arith.constant 0 : index
    %3 = vector.load %arg2[%c0_5, %c0_6] : memref<1x8xf32, #tpu.memory_space<vmem>>, vector<1x8xf32>
    %c0_7 = arith.constant 0 : index
    %c0_8 = arith.constant 0 : index
    %4 = vector.load %arg3[%c0_7, %c0_8] : memref<8x1xf32, #tpu.memory_space<vmem>>, vector<8x1xf32>
    %cst = arith.constant dense<0xFF800000> : vector<1xf32>
    %5 = vector.multi_reduction <maximumf>, %0, %cst [1] : vector<1x8xf32> to vector<1xf32>
    %6 = vector.shape_cast %5 : vector<1xf32> to vector<1x1xf32>
    %7 = vector.broadcast %6 : vector<1x1xf32> to vector<1x8xf32>
    %8 = arith.subf %0, %7 : vector<1x8xf32>
    %9 = math.exp %8 : vector<1x8xf32>
    %10 = vector.broadcast %3 : vector<1x8xf32> to vector<8x8xf32>
    %11 = vector.broadcast %4 : vector<8x1xf32> to vector<8x8xf32>
    %12 = arith.cmpf oge, %10, %11 : vector<8x8xf32>
    %13 = arith.extui %12 : vector<8x8xi1> to vector<8x8xi32>
    %14 = arith.sitofp %13 : vector<8x8xi32> to vector<8x8xf32>
    %15 = vector.broadcast %9 : vector<1x8xf32> to vector<8x8xf32>
    %16 = arith.mulf %14, %15 : vector<8x8xf32>
    %cst_9 = arith.constant dense<0.000000e+00> : vector<8xf32>
    %17 = vector.multi_reduction <add>, %16, %cst_9 [1] : vector<8x8xf32> to vector<8xf32>
    %18 = vector.shape_cast %17 : vector<8xf32> to vector<8x1xf32>
    %19 = math.log %18 : vector<8x1xf32>
    %20 = vector.broadcast %6 : vector<1x1xf32> to vector<1x8xf32>
    %21 = arith.subf %0, %20 : vector<1x8xf32>
    %22 = arith.mulf %1, %21 : vector<1x8xf32>
    %cst_10 = arith.constant dense<0.000000e+00> : vector<1xf32>
    %23 = vector.multi_reduction <add>, %22, %cst_10 [1] : vector<1x8xf32> to vector<1xf32>
    %24 = vector.shape_cast %23 : vector<1xf32> to vector<1x1xf32>
    %25 = arith.mulf %2, %19 : vector<8x1xf32>
    %cst_11 = arith.constant dense<0.000000e+00> : vector<1xf32>
    %26 = vector.multi_reduction <add>, %25, %cst_11 [0] : vector<8x1xf32> to vector<1xf32>
    %27 = vector.shape_cast %26 : vector<1xf32> to vector<1x1xf32>
    %cst_12 = arith.constant dense<0.000000e+00> : vector<1xf32>
    %28 = vector.multi_reduction <add>, %1, %cst_12 [1] : vector<1x8xf32> to vector<1xf32>
    %29 = vector.shape_cast %28 : vector<1xf32> to vector<1x1xf32>
    %cst_13 = arith.constant 0.000000e+00 : f32
    %30 = vector.broadcast %cst_13 : f32 to vector<1x1xf32>
    %31 = arith.cmpf ogt, %29, %30 : vector<1x1xf32>
    %32 = arith.subf %24, %27 : vector<1x1xf32>
    %cst_14 = arith.constant 0.000000e+00 : f32
    %33 = vector.broadcast %cst_14 : f32 to vector<1x1xf32>
    %34 = arith.subf %33, %32 : vector<1x1xf32>
    %cst_15 = arith.constant 1.000000e+00 : f32
    %35 = vector.broadcast %cst_15 : f32 to vector<1x1xf32>
    %36 = arith.maximumf %29, %35 : vector<1x1xf32>
    %37 = arith.divf %34, %36 : vector<1x1xf32>
    %cst_16 = arith.constant 0.000000e+00 : f32
    %38 = vector.broadcast %cst_16 : f32 to vector<1x1xf32>
    %39 = arith.select %31, %37, %38 : vector<1x1xi1>, vector<1x1xf32>
    %c0_17 = arith.constant 0 : index
    %c0_18 = arith.constant 0 : index
    %40 = vector.load %arg5[%c0_17, %c0_18] : memref<1x1xf32, #tpu.memory_space<vmem>>, vector<1x1xf32>
    tpu.vector_store %arg5[%c0_17, %c0_18], %39 {strides = array<i32>} : memref<1x1xf32, #tpu.memory_space<vmem>>, vector<1x1xf32>,
    return
  }
}

</mosaic_0001>

<llo_original>
// kernel: tpu_custom_call.1
$region0: #{tpu_custom_call.1}
  #allocation0 [shape = 'u32[]', space=smem, size = 0x4, offset = 0x4, fixed_abs, tag = 'smem constant byte address 0x4 - core index']
  #allocation1 [shape = 'u32[144,128]{1,0:T(1,128)}', space=vmem, size = 0x12000, scoped, tag = 'internal scratch']
  %s0 = inlined_call_operand.vmem [shape: f32[1,8], index: 0, kind: input, shape index: {}]
  %s1 = inlined_call_operand.vmem [shape: f32[8,1], index: 1, kind: input, shape index: {}]
  %s2 = inlined_call_operand.vmem [shape: f32[1,8], index: 2, kind: input, shape index: {}]
  %s3 = inlined_call_operand.vmem [shape: f32[8,1], index: 3, kind: input, shape index: {}]
  %s4 = inlined_call_operand.vmem [shape: f32[1,8], index: 4, kind: input, shape index: {}]
  %s5 = inlined_call_operand.hbm [shape: f32[1,1], index: 5, kind: output, shape index: {}]
  %s6 = sld [smem:[#allocation0]]
  $region30: #{tpu_custom_call.1} parent=0
    _
  %s8 = ssub.s32 1, %s6
  %s9 = scalar_select 0, %s8, %s6
  $region1: #{tpu_custom_call.1} parent=0
    #allocation2 [shape = 'u8[512]{0}', space=vmem, size = 0x400, scoped, tag = 'output window, operand 0, single buffered']
    #allocation3 [shape = 's32[1]{0}', space=sflag, size = 0x4, scoped, tag = 'scoped memory for tpu_custom_call.1']
    %10 = vsyncpa [#allocation3], 0
    // Predicated region
    $region2: #{tpu_custom_call.1} parent=1 // pred_check
      _
    $region3: #{tpu_custom_call.1} parent=1 // pred_check_branch
      %12 = sbr.rel (0) target = $region5
    $region4: #{tpu_custom_call.1} parent=1 // pred_region
      _
    $region5: #{tpu_custom_call.1} parent=1 // pred_fallthru
      _
    // Predicated region
    $region6: #{tpu_custom_call.1} parent=1 // pred_check
      _
    $region7: #{tpu_custom_call.1} parent=1 // pred_check_branch
      %14 = sbr.rel (0) target = $region9
    $region8: #{tpu_custom_call.1} parent=1 // pred_region
      _
    $region9: #{tpu_custom_call.1} parent=1 // pred_fallthru
      _
    // Predicated region
    $region10: #{tpu_custom_call.1} parent=1 // pred_check
      _
    $region11: #{tpu_custom_call.1} parent=1 // pred_check_branch
      %16 = sbr.rel (0) target = $region13
    $region12: #{tpu_custom_call.1} parent=1 // pred_region
      _
    $region13: #{tpu_custom_call.1} parent=1 // pred_fallthru
      _
    // Predicated region
    $region14: #{tpu_custom_call.1} parent=1 // pred_check
      _
    $region15: #{tpu_custom_call.1} parent=1 // pred_check_branch
      %18 = sbr.rel (0) target = $region17
    $region16: #{tpu_custom_call.1} parent=1 // pred_region
      _
    $region17: #{tpu_custom_call.1} parent=1 // pred_fallthru
      _
    // Predicated region
    $region18: #{tpu_custom_call.1} parent=1 // pred_check
      _
    $region19: #{tpu_custom_call.1} parent=1 // pred_check_branch
      %20 = sbr.rel (0) target = $region21
    $region20: #{tpu_custom_call.1} parent=1 // pred_region
      _
    $region21: #{tpu_custom_call.1} parent=1 // pred_fallthru
      _
    %v21 = vld [vmem:[%s4] sm:$0x1]
    %v22 = vld [vmem:[%s0] sm:$0x1]
    %v23 = vld [vmem:[%s1] sm:$0xff]
    %v24 = vld [vmem:[%s2] sm:$0x1]
    %v25 = vld [vmem:[%s3] sm:$0xff]
    %vm26 = vcmask 57344
    %v27 = vsel %vm26, %v21, -inf
    %28 = vmax.xlane.f32.xlu0 %v27
    %v29 = vpop.xlane.xlu0 %28
    %v30 = vsub.f32 %v21, %v29
    %v31 = vmul.f32 %v30, 1.442695
    %v32 = vpow.pop %v31
    %v34 = vlaneseq
    %v35 = vshrl.u32 %v34, 7
    %v36 = vsub.s32 0, %v35
    %v37 = vrot.slane %v24, %v36
    %40 = vset.pattern.permute.xlu0 0
    %41 = vperm.xlu0 %40, %v25
    %v42 = vpop.permute.xlu0 %41
    %vm44 = vcmp.ge.f32.partialorder %v37, %v42
    %v45 = vsel %vm44, 1, 0
    %v46 = vcvt.s32.f32 %v45
    %v48 = vlaneseq
    %v49 = vshrl.u32 %v48, 7
    %v50 = vsub.s32 0, %v49
    %v51 = vrot.slane %v32, %v50
    %v53 = vmul.f32 %v46, %v51
    %vm54 = vcmask 64512
    %v55 = vsel %vm54, %v53, 0.0
    %56 = vadd.xlane.f32.xlu0 %v55
    %v57 = vpop.xlane.xlu0 %56
    %v58 = vlog2.pop %v57
    %v59 = vmul.f32 %v58, 0.6931472
    %v60 = vmul.f32 %v22, %v30
    %v61 = vsel %vm26, %v60, 0.0
    %62 = vadd.xlane.f32.xlu0 %v61
    %v63 = vpop.xlane.xlu0 %62
    %v64 = vmul.f32 %v23, %v59
    %vm65 = vcmask 7168
    %v66 = vsel %vm65, %v64, 0.0
    %v67 = vrot.slane %v66, 4
    %v68 = vadd.f32 %v66, %v67
    %v69 = vrot.slane %v68, 2
    %v70 = vadd.f32 %v68, %v69
    %v71 = vrot.slane %v70, 1
    %v72 = vadd.f32 %v70, %v71
    %v73 = vsel %vm26, %v22, 0.0
    %74 = vadd.xlane.f32.xlu0 %v73
    %v75 = vpop.xlane.xlu0 %74
    %vm76 = vcmp.gt.f32.partialorder %v75, 0.0
    %v77 = vsub.f32 %v63, %v72
    %v78 = vsub.f32 0.0, %v77
    %v79 = vmax.f32 %v75, 1.0
    %v80 = vrcp.pop %v79
    %v81 = vmul.f32 %v78, %v80
    %v82 = vsel %vm76, %v81, 0.0
    %vm83 = vcmask 0
    %84 = vst.msk [vmem:[#allocation2] sm:$0x1] %vm83, %v82
    // Predicated region
    $region22: #{tpu_custom_call.1} parent=1 // pred_check
      _
    $region23: #{tpu_custom_call.1} parent=1 // pred_check_branch
      %86 = sbr.rel (0) target = $region25
    $region24: #{tpu_custom_call.1} parent=1 // pred_region
      %s88 = ssub.s32 16, 16
      %89 = vsyncadd [#allocation3], %s88
      %s91 = sshll.u32 [#allocation2], 4
      %s92 = int_to_ptr.vmem [resolvable:$true] %s91
      %94 = dma.vmem_to_hbm [thread:$0]  %s92, 16, %s5, [#allocation3]
    $region25: #{tpu_custom_call.1} parent=1 // pred_fallthru
      _
    // Predicated region
    $region26: #{tpu_custom_call.1} parent=1 // pred_check
      _
    $region27: #{tpu_custom_call.1} parent=1 // pred_check_branch
      %96 = sbr.rel (0) target = $region29
    $region28: #{tpu_custom_call.1} parent=1 // pred_region
      %97 = dma.done [#allocation3], 16
    $region29: #{tpu_custom_call.1} parent=1 // pred_fallthru
      _
    %98 = vsyncpa [#allocation3], 1

</llo_original>
